<compile_context>
chip_gen: v5e
topology: v5e:2x2
jax: 0.10.0
libtpu: 0.0.40
codegen_flags: <defaults>
</compile_context>

<pallas_src>
import math

import jax
import jax.numpy as jnp
from jax.experimental import pallas as pl
from jax.experimental.pallas import tpu as pltpu


# ----------------------------------------------------------------------------
# Pallas kernel: Bt batch elements (flattened to M = Bt*N rows), full MRFP.
# ----------------------------------------------------------------------------
def _mrfp_kernel(x_ref, w1_ref, tbl_ref, wf2_ref, bf2_ref, o_ref):
    # x_ref  : (M, Cin)        M = Bt*N rows of activations
    # w1_ref : (Cin, Ch)       fc1 weight (fc1 bias folded into tbl[8])
    # tbl_ref: (12, M, Ch)     per-row tables:
    #            0..2  stage-1 effective taps (shift -1, 0, +1; padding folded)
    #            3..7  stage-2 effective taps (shift -2..+2; per-segment, padded)
    #            8     stage-1 bias + fc1-bias contribution through stage-1 taps
    #            9     stage-2 bias (per segment, per row)
    #            10,11 LayerNorm gamma / beta (per segment, per row)
    # wf2_ref: (Ch, Cin)       fc2 weight     bf2_ref: (1, Cin) fc2 bias
    # o_ref  : (M, Cin)
    M = x_ref.shape[0]

    # ---- fc1 (MXU); hidden activations stay on-chip ----
    h = jnp.dot(x_ref[...].astype(jnp.float32), w1_ref[...],
                preferred_element_type=jnp.float32)

    # ---- stage 1: shared depthwise conv k=3 (per-segment zero padding folded
    #      into the per-row tap weights; rolls are XLU-slot work) ----
    acc = tbl_ref[8] + tbl_ref[1] * h
    acc = acc + tbl_ref[0] * pltpu.roll(h, shift=1, axis=0)       # tap at l-1
    acc = acc + tbl_ref[2] * pltpu.roll(h, shift=M - 1, axis=0)   # tap at l+1

    # ---- stage 2: per-segment depthwise conv (k=3 padded to 5 | k=5) ----
    acc2 = tbl_ref[9] + tbl_ref[5] * acc
    acc2 = acc2 + tbl_ref[3] * pltpu.roll(acc, shift=2, axis=0)     # l-2
    acc2 = acc2 + tbl_ref[4] * pltpu.roll(acc, shift=1, axis=0)     # l-1
    acc2 = acc2 + tbl_ref[6] * pltpu.roll(acc, shift=M - 1, axis=0) # l+1
    acc2 = acc2 + tbl_ref[7] * pltpu.roll(acc, shift=M - 2, axis=0) # l+2

    # ---- LayerNorm over channels (eps=1e-5), one-pass moments ----
    ch = acc2.shape[-1]
    inv_c = 1.0 / ch
    s1 = jnp.sum(acc2, axis=-1, keepdims=True)
    s2 = jnp.sum(acc2 * acc2, axis=-1, keepdims=True)
    mean = s1 * inv_c
    var = s2 * inv_c - mean * mean
    y = (acc2 - mean) * jax.lax.rsqrt(var + 1e-5)
    y = y * tbl_ref[10] + tbl_ref[11]

    # ---- GELU (MultiDWConv.actN) then GELU again (MRFP.act), tanh form (EUP) ----
    def _gelu(v):
        return 0.5 * v * (1.0 + jnp.tanh(0.7978845608028654 *
                                         (v + 0.044715 * v * v * v)))
    y = _gelu(_gelu(y))

    # TODO(synk): dropout omitted — nn.Dropout is the identity in eval()/inference.

    # ---- fc2 (MXU) ----
    out = jnp.dot(y, wf2_ref[...], preferred_element_type=jnp.float32) + bf2_ref[0]
    o_ref[...] = out.astype(o_ref.dtype)


# ----------------------------------------------------------------------------
# Parameter construction.
# ----------------------------------------------------------------------------
def init_params(key, in_features, hidden):
    dh = hidden // 2
    ks = jax.random.split(key, 24)
    u = lambda k, shape, bound: jax.random.uniform(
        k, shape, jnp.float32, -bound, bound)
    p = {
        "fc1_w": u(ks[0], (hidden, in_features), 1 / math.sqrt(in_features)),
        "fc1_b": u(ks[1], (hidden,), 1 / math.sqrt(in_features)),
        "fc2_w": u(ks[2], (in_features, hidden), 1 / math.sqrt(hidden)),
        "fc2_b": u(ks[3], (in_features,), 1 / math.sqrt(hidden)),
        "dwconv_w": u(ks[4], (hidden, 1, 3), 1 / math.sqrt(3)),
        "dwconv_b": u(ks[5], (hidden,), 1 / math.sqrt(3)),
    }
    idx = 6
    for i, K in zip(range(1, 7), [3, 5, 3, 5, 3, 5]):
        p[f"dwconv{i}_w"] = u(ks[idx], (dh, 1, K), 1 / math.sqrt(K)); idx += 1
        p[f"dwconv{i}_b"] = u(ks[idx], (dh,), 1 / math.sqrt(K)); idx += 1
    # LayerNorm params randomized (instead of PyTorch's ones/zeros) so the
    # per-segment parameter selection is actually exercised by the check.
    for j in range(1, 4):
        p[f"ln{j}_g"] = jax.random.uniform(ks[idx], (hidden,), jnp.float32, 0.5, 1.5); idx += 1
        p[f"ln{j}_b"] = jax.random.uniform(ks[idx], (hidden,), jnp.float32, -0.5, 0.5); idx += 1
    return p


# ----------------------------------------------------------------------------
# Host-side packing: fold all static per-segment selection + conv padding masks
# into per-row effective weight tables (done once, outside the kernel).
# ----------------------------------------------------------------------------
def _pack_inputs(p, N, Bt, i0, i1):
    f32 = jnp.float32
    hidden = p["fc1_w"].shape[0]

    w1 = p["fc1_w"].T.astype(f32)                       # (Cin, Ch)
    wf2 = p["fc2_w"].T.astype(f32)                      # (Ch, Cin)
    bf2 = p["fc2_b"][None, :].astype(f32)               # (1, Cin)

    wa = p["dwconv_w"][:, 0, :].T.astype(f32)           # (3, Ch) shared k=3 taps
    ba = p["dwconv_b"].astype(f32)                       # (Ch,)

    # Stage-2 per-segment taps: first half of channels k=3 (centred in a 5-tap
    # window), second half k=5 — exactly the Conv1d(k=3,pad=1)/(k=5,pad=2) pair.
    w2_segs, b2_segs, g_segs, be_segs = [], [], [], []
    for s in range(3):
        w3 = p[f"dwconv{2 * s + 1}_w"][:, 0, :]          # (dh, 3)
        w3p = jnp.pad(w3, ((0, 0), (1, 1)))              # (dh, 5)
        w5 = p[f"dwconv{2 * s + 2}_w"][:, 0, :]          # (dh, 5)
        w2_segs.append(jnp.concatenate([w3p, w5], 0).T)  # (5, Ch)
        b2_segs.append(jnp.concatenate(
            [p[f"dwconv{2 * s + 1}_b"], p[f"dwconv{2 * s + 2}_b"]]))
        g_segs.append(p[f"ln{s + 1}_g"])
        be_segs.append(p[f"ln{s + 1}_b"])
    w2 = jnp.stack(w2_segs, 0).astype(f32)               # (3, 5, Ch)
    b2 = jnp.stack(b2_segs, 0).astype(f32)               # (3, Ch)
    g = jnp.stack(g_segs, 0).astype(f32)                 # (3, Ch)
    be = jnp.stack(be_segs, 0).astype(f32)               # (3, Ch)

    # Per-position segment id and padding masks: a tap at shift s is valid only
    # if pos+s is inside the sequence AND in the same segment — this is the
    # per-segment zero padding of the depthwise convs (and, after batch
    # flattening, also guarantees rolls never mix batch elements).
    pos = jnp.arange(N)
    seg_of = lambda q: (q >= i0).astype(jnp.int32) + (q >= i1).astype(jnp.int32)
    seg = seg_of(pos)                                     # (N,)

    def ok(s):
        nb = pos + s
        return ((nb >= 0) & (nb < N) & (seg_of(nb) == seg)).astype(f32)

    rows = []
    # rows 0..2: stage-1 effective taps (shift = k-1), mask folded into weight
    for k in range(3):
        rows.append(ok(k - 1)[:, None] * wa[k][None, :])          # (N, Ch)
    # rows 3..7: stage-2 effective taps (shift = k-2), per-segment weights
    w2_row = w2[seg]                                              # (N, 5, Ch)
    for k in range(5):
        rows.append(ok(k - 2)[:, None] * w2_row[:, k, :])         # (N, Ch)
    # row 8: stage-1 bias + fc1-bias contribution folded through stage-1 taps
    tap_sum = rows[0] + rows[1] + rows[2]
    rows.append(ba[None, :] + tap_sum * p["fc1_b"].astype(f32)[None, :])
    # rows 9..11: stage-2 bias / LN gamma / LN beta, selected per row
    rows.append(b2[seg])
    rows.append(g[seg])
    rows.append(be[seg])

    tbl = jnp.stack(rows, axis=0)                         # (12, N, Ch)
    tbl = jnp.tile(tbl, (1, Bt, 1))                       # (12, Bt*N, Ch)
    return w1, tbl, wf2, bf2


# ----------------------------------------------------------------------------
# Wrapper: one fused pallas_call, grid over batch tiles of Bt elements.
# ----------------------------------------------------------------------------
def mrfp_forward(x, idxs, params, Bt=None):
    """x: (B, N, Cin); idxs: (i0, i1) static Python ints."""
    B, N, Cin = x.shape
    i0, i1 = int(idxs[0]), int(idxs[1])
    Ch = params["fc1_w"].shape[0]

    if Bt is None:
        # Fill MXU rows (>=256 for v6e/v7x), but keep >= 2 grid steps when
        # possible so v7x's two TensorCores both get work.
        target = max(1, (256 + N - 1) // N)
        divs = [d for d in range(1, B + 1) if B % d == 0]
        Bt = max(d for d in divs if d <= target)
        if B >= 2 and B // Bt < 2:
            Bt = max(d for d in divs if B // d >= 2)
    assert B % Bt == 0, "batch must be divisible by the batch tile"
    M = Bt * N

    w1, tbl, wf2, bf2 = _pack_inputs(params, N, Bt, i0, i1)

    x2 = x.reshape(B * N, Cin)
    const2 = lambda g: (0, 0)
    const3 = lambda g: (0, 0, 0)

    out = pl.pallas_call(
        _mrfp_kernel,
        out_shape=jax.ShapeDtypeStruct((B * N, Cin), x.dtype),
        grid_spec=pltpu.PrefetchScalarGridSpec(
            num_scalar_prefetch=0,
            grid=(B // Bt,),
            in_specs=[
                pl.BlockSpec((M, Cin), lambda b: (b, 0)),   # x (Bt elems, flattened)
                pl.BlockSpec((Cin, Ch), const2),            # fc1 W (resident)
                pl.BlockSpec((12, M, Ch), const3),          # fused per-row tables
                pl.BlockSpec((Ch, Cin), const2),            # fc2 W
                pl.BlockSpec((1, Cin), const2),             # fc2 b
            ],
            out_specs=pl.BlockSpec((M, Cin), lambda b: (b, 0)),
        ),
        compiler_params=pltpu.CompilerParams(
            dimension_semantics=("parallel",),
            vmem_limit_bytes=32 * 1024 * 1024,   # v7x scoped default; plenty here
        ),
    )(x2, w1, tbl, wf2, bf2)
    return out.reshape(B, N, Cin)


# ----------------------------------------------------------------------------
# Pure-JAX reference (mirrors the PyTorch forward) for the sanity check.
# ----------------------------------------------------------------------------
def _ref_forward(x, idxs, p, approximate_gelu=False):
    hp = jax.lax.Precision.HIGHEST
    i0, i1 = int(idxs[0]), int(idxs[1])
    hidden = p["fc1_w"].shape[0]
    dh = hidden // 2

    def gelu(v):
        if approximate_gelu:
            return 0.5 * v * (1.0 + jnp.tanh(0.7978845608028654 *
                                             (v + 0.044715 * v ** 3)))
        return 0.5 * v * (1.0 + jax.lax.erf(v / math.sqrt(2.0)))

    def dwconv(xnc, w, b, pad):      # xnc: (B, L, C); w: (C, 1, K); b: (C,)
        L, K = xnc.shape[1], w.shape[-1]
        xp = jnp.pad(xnc, ((0, 0), (pad, pad), (0, 0)))
        return b[None, None, :] + sum(
            w[:, 0, k][None, None, :] * xp[:, k:k + L, :] for k in range(K))

    h = jnp.dot(x, p["fc1_w"].T, precision=hp) + p["fc1_b"]
    segs = [h[:, :i0], h[:, i0:i1], h[:, i1:]]
    outs = []
    for s, segd in enumerate(segs):
        y = dwconv(segd, p["dwconv_w"], p["dwconv_b"], 1)
        y1 = dwconv(y[..., :dh], p[f"dwconv{2 * s + 1}_w"], p[f"dwconv{2 * s + 1}_b"], 1)
        y2 = dwconv(y[..., dh:], p[f"dwconv{2 * s + 2}_w"], p[f"dwconv{2 * s + 2}_b"], 2)
        y = jnp.concatenate([y1, y2], axis=-1)
        mean = jnp.mean(y, -1, keepdims=True)
        var = jnp.mean((y - mean) ** 2, -1, keepdims=True)
        y = (y - mean) * jax.lax.rsqrt(var + 1e-5) * p[f"ln{s + 1}_g"] + p[f"ln{s + 1}_b"]
        outs.append(gelu(y))
    y = jnp.concatenate(outs, axis=1)
    y = gelu(y)
    return jnp.dot(y, p["fc2_w"].T, precision=hp) + p["fc2_b"]


if __name__ == "__main__":
    B, N = 4, 16
    in_features, hidden_features = 32, 128     # hidden kept lane-dense (128 lanes)
    idxs = (5, 11)                             # -> segments of length 5, 6, 5

    key = jax.random.PRNGKey(0)
    kx, kp = jax.random.split(key)
    x = jax.random.normal(kx, (B, N, in_features), jnp.float32)
    params = init_params(kp, in_features, hidden_features)

    out = jax.block_until_ready(mrfp_forward(x, idxs, params))
    assert out.shape == (B, N, in_features)

    # Tight check against a reference that matches the kernel's tanh-GELU
    # (validates convs / segmentation / LN / matmuls), plus a check against the
    # exact-erf PyTorch semantics with margin for the documented GELU approx.
    ref_tanh = _ref_forward(x, idxs, params, approximate_gelu=True)
    ref_erf = _ref_forward(x, idxs, params, approximate_gelu=False)
    err_tanh = float(jnp.max(jnp.abs(out - ref_tanh)))
    err_erf = float(jnp.max(jnp.abs(out - ref_erf)))
    assert jnp.allclose(out, ref_tanh, atol=5e-3, rtol=5e-3), (
        f"mismatch vs tanh-GELU reference (max abs err {err_tanh:.3e})")
    assert jnp.allclose(out, ref_erf, atol=2e-2, rtol=2e-2), (
        f"mismatch vs exact-erf reference (max abs err {err_erf:.3e})")
    print("KERNEL_OK")
</pallas_src>

<mosaic_0001>
module attributes {stable_mosaic.version = 11 : i64} {
  func.func @_mrfp_kernel(%arg0: i32, %arg1: memref<32x32xf32, #tpu.memory_space<vmem>>, %arg2: memref<32x128xf32, #tpu.memory_space<vmem>>, %arg3: memref<12x32x128xf32, #tpu.memory_space<vmem>>, %arg4: memref<128x32xf32, #tpu.memory_space<vmem>>, %arg5: memref<1x32xf32, #tpu.memory_space<vmem>>, %arg6: memref<32x32xf32, #tpu.memory_space<vmem>>) attributes {dimension_semantics = [#tpu.dimension_semantics<parallel>], iteration_bounds = array<i64: 2>, scalar_prefetch = 0 : i64, scratch_operands = 0 : i64, tpu.core_type = #tpu.core_type<tc>, window_params = [{transform_indices = @transform_0, window_bounds = array<i64: 32, 32>}, {pipeline_mode = #tpu.pipeline_mode<synchronous>, transform_indices = @transform_1, window_bounds = array<i64: 32, 128>}, {pipeline_mode = #tpu.pipeline_mode<synchronous>, transform_indices = @transform_2, window_bounds = array<i64: 12, 32, 128>}, {pipeline_mode = #tpu.pipeline_mode<synchronous>, transform_indices = @transform_3, window_bounds = array<i64: 128, 32>}, {pipeline_mode = #tpu.pipeline_mode<synchronous>, transform_indices = @transform_4, window_bounds = array<i64: 1, 32>}, {transform_indices = @transform_5, window_bounds = array<i64: 32, 32>}]} {
    %c0 = arith.constant 0 : index
    %c0_0 = arith.constant 0 : index
    %0 = vector.load %arg1[%c0, %c0_0] : memref<32x32xf32, #tpu.memory_space<vmem>>, vector<32x32xf32>
    %c0_1 = arith.constant 0 : index
    %c0_2 = arith.constant 0 : index
    %1 = vector.load %arg2[%c0_1, %c0_2] : memref<32x128xf32, #tpu.memory_space<vmem>>, vector<32x128xf32>
    %cst = arith.constant dense<0.000000e+00> : vector<32x128xf32>
    %2 = tpu.matmul %0, %1, %cst {dimension_numbers = #tpu.dot_dimension_numbers<[1], [0], [0], [1], [0, 0, 1, 1], [], []>} : vector<32x32xf32>, vector<32x128xf32>, vector<32x128xf32> -> vector<32x128xf32>
    %c8 = arith.constant 8 : index
    %c0_3 = arith.constant 0 : index
    %c0_4 = arith.constant 0 : index
    %3 = vector.load %arg3[%c8, %c0_3, %c0_4] : memref<12x32x128xf32, #tpu.memory_space<vmem>>, vector<1x32x128xf32>
    %4 = vector.shape_cast %3 : vector<1x32x128xf32> to vector<32x128xf32>
    %c1 = arith.constant 1 : index
    %c0_5 = arith.constant 0 : index
    %c0_6 = arith.constant 0 : index
    %5 = vector.load %arg3[%c1, %c0_5, %c0_6] : memref<12x32x128xf32, #tpu.memory_space<vmem>>, vector<1x32x128xf32>
    %6 = vector.shape_cast %5 : vector<1x32x128xf32> to vector<32x128xf32>
    %7 = arith.mulf %6, %2 : vector<32x128xf32>
    %8 = arith.addf %4, %7 : vector<32x128xf32>
    %c0_7 = arith.constant 0 : index
    %c0_8 = arith.constant 0 : index
    %c0_9 = arith.constant 0 : index
    %9 = vector.load %arg3[%c0_7, %c0_8, %c0_9] : memref<12x32x128xf32, #tpu.memory_space<vmem>>, vector<1x32x128xf32>
    %10 = vector.shape_cast %9 : vector<1x32x128xf32> to vector<32x128xf32>
    %c1_i32 = arith.constant 1 : i32
    %11 = tpu.dynamic_rotate %2 by %c1_i32 dim 0 : vector<32x128xf32>, i32 -> vector<32x128xf32>
    %12 = arith.mulf %10, %11 : vector<32x128xf32>
    %13 = arith.addf %8, %12 : vector<32x128xf32>
    %c2 = arith.constant 2 : index
    %c0_10 = arith.constant 0 : index
    %c0_11 = arith.constant 0 : index
    %14 = vector.load %arg3[%c2, %c0_10, %c0_11] : memref<12x32x128xf32, #tpu.memory_space<vmem>>, vector<1x32x128xf32>
    %15 = vector.shape_cast %14 : vector<1x32x128xf32> to vector<32x128xf32>
    %c31_i32 = arith.constant 31 : i32
    %16 = tpu.dynamic_rotate %2 by %c31_i32 dim 0 : vector<32x128xf32>, i32 -> vector<32x128xf32>
    %17 = arith.mulf %15, %16 : vector<32x128xf32>
    %18 = arith.addf %13, %17 : vector<32x128xf32>
    %c9 = arith.constant 9 : index
    %c0_12 = arith.constant 0 : index
    %c0_13 = arith.constant 0 : index
    %19 = vector.load %arg3[%c9, %c0_12, %c0_13] : memref<12x32x128xf32, #tpu.memory_space<vmem>>, vector<1x32x128xf32>
    %20 = vector.shape_cast %19 : vector<1x32x128xf32> to vector<32x128xf32>
    %c5 = arith.constant 5 : index
    %c0_14 = arith.constant 0 : index
    %c0_15 = arith.constant 0 : index
    %21 = vector.load %arg3[%c5, %c0_14, %c0_15] : memref<12x32x128xf32, #tpu.memory_space<vmem>>, vector<1x32x128xf32>
    %22 = vector.shape_cast %21 : vector<1x32x128xf32> to vector<32x128xf32>
    %23 = arith.mulf %22, %18 : vector<32x128xf32>
    %24 = arith.addf %20, %23 : vector<32x128xf32>
    %c3 = arith.constant 3 : index
    %c0_16 = arith.constant 0 : index
    %c0_17 = arith.constant 0 : index
    %25 = vector.load %arg3[%c3, %c0_16, %c0_17] : memref<12x32x128xf32, #tpu.memory_space<vmem>>, vector<1x32x128xf32>
    %26 = vector.shape_cast %25 : vector<1x32x128xf32> to vector<32x128xf32>
    %c2_i32 = arith.constant 2 : i32
    %27 = tpu.dynamic_rotate %18 by %c2_i32 dim 0 : vector<32x128xf32>, i32 -> vector<32x128xf32>
    %28 = arith.mulf %26, %27 : vector<32x128xf32>
    %29 = arith.addf %24, %28 : vector<32x128xf32>
    %c4 = arith.constant 4 : index
    %c0_18 = arith.constant 0 : index
    %c0_19 = arith.constant 0 : index
    %30 = vector.load %arg3[%c4, %c0_18, %c0_19] : memref<12x32x128xf32, #tpu.memory_space<vmem>>, vector<1x32x128xf32>
    %31 = vector.shape_cast %30 : vector<1x32x128xf32> to vector<32x128xf32>
    %c1_i32_20 = arith.constant 1 : i32
    %32 = tpu.dynamic_rotate %18 by %c1_i32_20 dim 0 : vector<32x128xf32>, i32 -> vector<32x128xf32>
    %33 = arith.mulf %31, %32 : vector<32x128xf32>
    %34 = arith.addf %29, %33 : vector<32x128xf32>
    %c6 = arith.constant 6 : index
    %c0_21 = arith.constant 0 : index
    %c0_22 = arith.constant 0 : index
    %35 = vector.load %arg3[%c6, %c0_21, %c0_22] : memref<12x32x128xf32, #tpu.memory_space<vmem>>, vector<1x32x128xf32>
    %36 = vector.shape_cast %35 : vector<1x32x128xf32> to vector<32x128xf32>
    %c31_i32_23 = arith.constant 31 : i32
    %37 = tpu.dynamic_rotate %18 by %c31_i32_23 dim 0 : vector<32x128xf32>, i32 -> vector<32x128xf32>
    %38 = arith.mulf %36, %37 : vector<32x128xf32>
    %39 = arith.addf %34, %38 : vector<32x128xf32>
    %c7 = arith.constant 7 : index
    %c0_24 = arith.constant 0 : index
    %c0_25 = arith.constant 0 : index
    %40 = vector.load %arg3[%c7, %c0_24, %c0_25] : memref<12x32x128xf32, #tpu.memory_space<vmem>>, vector<1x32x128xf32>
    %41 = vector.shape_cast %40 : vector<1x32x128xf32> to vector<32x128xf32>
    %c30_i32 = arith.constant 30 : i32
    %42 = tpu.dynamic_rotate %18 by %c30_i32 dim 0 : vector<32x128xf32>, i32 -> vector<32x128xf32>
    %43 = arith.mulf %41, %42 : vector<32x128xf32>
    %44 = arith.addf %39, %43 : vector<32x128xf32>
    %cst_26 = arith.constant dense<0.000000e+00> : vector<32xf32>
    %45 = vector.multi_reduction <add>, %44, %cst_26 [1] : vector<32x128xf32> to vector<32xf32>
    %46 = vector.shape_cast %45 : vector<32xf32> to vector<32x1xf32>
    %47 = arith.mulf %44, %44 : vector<32x128xf32>
    %cst_27 = arith.constant dense<0.000000e+00> : vector<32xf32>
    %48 = vector.multi_reduction <add>, %47, %cst_27 [1] : vector<32x128xf32> to vector<32xf32>
    %49 = vector.shape_cast %48 : vector<32xf32> to vector<32x1xf32>
    %cst_28 = arith.constant 7.812500e-03 : f32
    %50 = vector.broadcast %cst_28 : f32 to vector<32x1xf32>
    %51 = arith.mulf %46, %50 : vector<32x1xf32>
    %cst_29 = arith.constant 7.812500e-03 : f32
    %52 = vector.broadcast %cst_29 : f32 to vector<32x1xf32>
    %53 = arith.mulf %49, %52 : vector<32x1xf32>
    %54 = arith.mulf %51, %51 : vector<32x1xf32>
    %55 = arith.subf %53, %54 : vector<32x1xf32>
    %56 = vector.broadcast %51 : vector<32x1xf32> to vector<32x128xf32>
    %57 = arith.subf %44, %56 : vector<32x128xf32>
    %cst_30 = arith.constant 9.99999974E-6 : f32
    %58 = vector.broadcast %cst_30 : f32 to vector<32x1xf32>
    %59 = arith.addf %55, %58 : vector<32x1xf32>
    %60 = math.rsqrt %59 : vector<32x1xf32>
    %61 = vector.broadcast %60 : vector<32x1xf32> to vector<32x128xf32>
    %62 = arith.mulf %57, %61 : vector<32x128xf32>
    %c10 = arith.constant 10 : index
    %c0_31 = arith.constant 0 : index
    %c0_32 = arith.constant 0 : index
    %63 = vector.load %arg3[%c10, %c0_31, %c0_32] : memref<12x32x128xf32, #tpu.memory_space<vmem>>, vector<1x32x128xf32>
    %64 = vector.shape_cast %63 : vector<1x32x128xf32> to vector<32x128xf32>
    %65 = arith.mulf %62, %64 : vector<32x128xf32>
    %c11 = arith.constant 11 : index
    %c0_33 = arith.constant 0 : index
    %c0_34 = arith.constant 0 : index
    %66 = vector.load %arg3[%c11, %c0_33, %c0_34] : memref<12x32x128xf32, #tpu.memory_space<vmem>>, vector<1x32x128xf32>
    %67 = vector.shape_cast %66 : vector<1x32x128xf32> to vector<32x128xf32>
    %68 = arith.addf %65, %67 : vector<32x128xf32>
    %cst_35 = arith.constant 5.000000e-01 : f32
    %69 = vector.broadcast %cst_35 : f32 to vector<32x128xf32>
    %70 = arith.mulf %69, %68 : vector<32x128xf32>
    %cst_36 = arith.constant 4.471500e-02 : f32
    %71 = vector.broadcast %cst_36 : f32 to vector<32x128xf32>
    %72 = arith.mulf %71, %68 : vector<32x128xf32>
    %73 = arith.mulf %72, %68 : vector<32x128xf32>
    %74 = arith.mulf %73, %68 : vector<32x128xf32>
    %75 = arith.addf %68, %74 : vector<32x128xf32>
    %cst_37 = arith.constant 0.797884583 : f32
    %76 = vector.broadcast %cst_37 : f32 to vector<32x128xf32>
    %77 = arith.mulf %76, %75 : vector<32x128xf32>
    %78 = math.tanh %77 : vector<32x128xf32>
    %cst_38 = arith.constant 1.000000e+00 : f32
    %79 = vector.broadcast %cst_38 : f32 to vector<32x128xf32>
    %80 = arith.addf %79, %78 : vector<32x128xf32>
    %81 = arith.mulf %70, %80 : vector<32x128xf32>
    %cst_39 = arith.constant 5.000000e-01 : f32
    %82 = vector.broadcast %cst_39 : f32 to vector<32x128xf32>
    %83 = arith.mulf %82, %81 : vector<32x128xf32>
    %cst_40 = arith.constant 4.471500e-02 : f32
    %84 = vector.broadcast %cst_40 : f32 to vector<32x128xf32>
    %85 = arith.mulf %84, %81 : vector<32x128xf32>
    %86 = arith.mulf %85, %81 : vector<32x128xf32>
    %87 = arith.mulf %86, %81 : vector<32x128xf32>
    %88 = arith.addf %81, %87 : vector<32x128xf32>
    %cst_41 = arith.constant 0.797884583 : f32
    %89 = vector.broadcast %cst_41 : f32 to vector<32x128xf32>
    %90 = arith.mulf %89, %88 : vector<32x128xf32>
    %91 = math.tanh %90 : vector<32x128xf32>
    %cst_42 = arith.constant 1.000000e+00 : f32
    %92 = vector.broadcast %cst_42 : f32 to vector<32x128xf32>
    %93 = arith.addf %92, %91 : vector<32x128xf32>
    %94 = arith.mulf %83, %93 : vector<32x128xf32>
    %c0_43 = arith.constant 0 : index
    %c0_44 = arith.constant 0 : index
    %95 = vector.load %arg4[%c0_43, %c0_44] : memref<128x32xf32, #tpu.memory_space<vmem>>, vector<128x32xf32>
    %cst_45 = arith.constant dense<0.000000e+00> : vector<32x32xf32>
    %96 = tpu.matmul %94, %95, %cst_45 {dimension_numbers = #tpu.dot_dimension_numbers<[1], [0], [0], [1], [0, 0, 1, 1], [], []>} : vector<32x128xf32>, vector<128x32xf32>, vector<32x32xf32> -> vector<32x32xf32>
    %c0_46 = arith.constant 0 : index
    %c0_47 = arith.constant 0 : index
    %97 = vector.load %arg5[%c0_46, %c0_47] : memref<1x32xf32, #tpu.memory_space<vmem>>, vector<1x32xf32>
    %98 = vector.shape_cast %97 : vector<1x32xf32> to vector<32xf32>
    %99 = vector.shape_cast %98 : vector<32xf32> to vector<1x32xf32>
    %100 = vector.broadcast %99 : vector<1x32xf32> to vector<32x32xf32>
    %101 = arith.addf %96, %100 : vector<32x32xf32>
    %c0_48 = arith.constant 0 : index
    %c0_49 = arith.constant 0 : index
    %102 = vector.load %arg6[%c0_48, %c0_49] : memref<32x32xf32, #tpu.memory_space<vmem>>, vector<32x32xf32>
    tpu.vector_store %arg6[%c0_48, %c0_49], %101 {strides = array<i32>} : memref<32x32xf32, #tpu.memory_space<vmem>>, vector<32x32xf32>,
    return
  }
  func.func @transform_0(%arg0: i32) -> (i32, i32) {
    %c0_i32 = arith.constant 0 : i32
    %c0_i32_0 = arith.constant 0 : i32
    return %arg0, %c0_i32 : i32, i32
  }
  func.func @transform_1(%arg0: i32) -> (i32, i32) {
    %c0_i32 = arith.constant 0 : i32
    %c0_i32_0 = arith.constant 0 : i32
    %c0_i32_1 = arith.constant 0 : i32
    return %c0_i32, %c0_i32_0 : i32, i32
  }
  func.func @transform_2(%arg0: i32) -> (i32, i32, i32) {
    %c0_i32 = arith.constant 0 : i32
    %c0_i32_0 = arith.constant 0 : i32
    %c0_i32_1 = arith.constant 0 : i32
    %c0_i32_2 = arith.constant 0 : i32
    return %c0_i32, %c0_i32_0, %c0_i32_1 : i32, i32, i32
  }
  func.func @transform_3(%arg0: i32) -> (i32, i32) {
    %c0_i32 = arith.constant 0 : i32
    %c0_i32_0 = arith.constant 0 : i32
    %c0_i32_1 = arith.constant 0 : i32
    return %c0_i32, %c0_i32_0 : i32, i32
  }
  func.func @transform_4(%arg0: i32) -> (i32, i32) {
    %c0_i32 = arith.constant 0 : i32
    %c0_i32_0 = arith.constant 0 : i32
    %c0_i32_1 = arith.constant 0 : i32
    return %c0_i32, %c0_i32_0 : i32, i32
  }
  func.func @transform_5(%arg0: i32) -> (i32, i32) {
    %c0_i32 = arith.constant 0 : i32
    %c0_i32_0 = arith.constant 0 : i32
    return %arg0, %c0_i32 : i32, i32
  }
}

</mosaic_0001>

<llo_original>
// kernel: tpu_custom_call.1
$region0: #{tpu_custom_call.1}
  #allocation0 [shape = 'u32[]', space=smem, size = 0x4, offset = 0x4, fixed_abs, tag = 'smem constant byte address 0x4 - core index']
  #allocation1 [shape = 'u32[72,128]{1,0:T(1,128)}', space=vmem, size = 0x9000, scoped, tag = 'internal scratch']
  %s0 = inlined_call_operand.vmem [shape: f32[64,32], index: 0, kind: input, shape index: {}]
  %s1 = inlined_call_operand.vmem [shape: f32[32,128], index: 1, kind: input, shape index: {}]
  %s2 = inlined_call_operand.hbm [shape: f32[12,32,128], index: 2, kind: input, shape index: {}]
  %s3 = inlined_call_operand.vmem [shape: f32[128,32], index: 3, kind: input, shape index: {}]
  %s4 = inlined_call_operand.vmem [shape: f32[1,32], index: 4, kind: input, shape index: {}]
  %s5 = inlined_call_operand.vmem [shape: f32[64,32], index: 5, kind: output, shape index: {}]
  %s6 = sld [smem:[#allocation0]]
  $region57: #{tpu_custom_call.1} parent=0
    _
  %s8 = ssub.s32 1, %s6
  %s9 = scalar_select 0, %s8, %s6
  $region1: #{tpu_custom_call.1} parent=0
    #allocation2 [shape = 'u8[196608]{0}', space=vmem, size = 0x30000, scoped, tag = 'input window, operand 2, single buffered']
    #allocation3 [shape = 's32[2]{0}', space=sflag, size = 0x8, scoped, tag = 'scoped memory for tpu_custom_call.1']
    %10 = vsyncpa [#allocation3], 0
    loop: start=0, step=1, limit=4
    $region2: #{tpu_custom_call.1} parent=1 // loop_pre_header
      _
    $region3: #{tpu_custom_call.1} parent=1 // loop_header
      %s12 = sphi 0, %s16
      %p13 = scmp.ge.s32.totalorder %s12, 4
      %s22 = sphi 0, %s24
      %s25 = sphi 0, %s22
      %s26 = sphi 0, %s25
      %s42 = sphi 0, %s26
      %s46 = sphi 0, %s46
      %s48 = sphi 0, %s46
      %s49 = sphi 0, %s48
      %s63 = sphi 0, %s49
      %s67 = sphi 0, %s67
      %s69 = sphi 0, %s67
      %s70 = sphi 0, %s69
      %s84 = sphi 0, %s70
      %s88 = sphi 0, %s88
      %s90 = sphi 0, %s88
      %s91 = sphi 0, %s90
      %s105 = sphi 0, %s91
      %s109 = sphi 0, %s109
      %s111 = sphi 0, %s109
      %s112 = sphi 0, %s111
      %s126 = sphi 0, %s112
      %s132 = sphi 0, %s134
      %s135 = sphi 0, %s132
      %s136 = sphi 0, %s135
      %s152 = sphi 0, %s136
    $region4: #{tpu_custom_call.1} parent=1 // loop_header_branch
      %15 = sbr.rel (%p13) target = $region8
    $region5: #{tpu_custom_call.1} parent=1 // loop_body
      %s17 = ssub.s32 %s12, 1
      %s18 = ssub.s32 %s12, 2
      %s19 = sadd.s32 %s12, 1
      %s20 = ssub.s32 %s12, %s19
      %p21 = scmp.eq.s32.totalorder %s20, 0
      %s23 = sadd.s32 %s22, 1
      %s24 = scalar_select %p21, %s22, %s23
      %p27 = pneg %p21
      %p28 = scmp.eq.s32.totalorder %s12, 1
      %p29 = por %p27, %p28
      %p30 = scmp.ne.s32.totalorder %s22, %s25
      %p31 = scmp.eq.s32.totalorder %s12, 0
      %p32 = por %p30, %p31
      %p33 = scmp.ne.s32.totalorder %s22, %s25
      %p34 = scmp.eq.s32.totalorder %s17, 1
      %p35 = por %p33, %p34
      %p36 = scmp.ne.s32.totalorder %s25, %s26
      %p37 = scmp.eq.s32.totalorder %s17, 0
      %p38 = por %p36, %p37
      %p39 = scmp.ne.s32.totalorder %s25, %s26
      %p40 = scmp.eq.s32.totalorder %s18, 1
      %p41 = por %p39, %p40
      %p43 = scmp.ne.s32.totalorder %s26, %s42
      %p44 = scmp.eq.s32.totalorder %s18, 0
      %p45 = por %p43, %p44
      %s47 = sadd.s32 %s46, 1
      %p50 = scmp.eq.s32.totalorder %s12, 1
      %p51 = scmp.ne.s32.totalorder %s46, %s48
      %p52 = scmp.eq.s32.totalorder %s12, 0
      %p53 = por %p51, %p52
      %p54 = scmp.ne.s32.totalorder %s46, %s48
      %p55 = scmp.eq.s32.totalorder %s17, 1
      %p56 = por %p54, %p55
      %p57 = scmp.ne.s32.totalorder %s48, %s49
      %p58 = scmp.eq.s32.totalorder %s17, 0
      %p59 = por %p57, %p58
      %p60 = scmp.ne.s32.totalorder %s48, %s49
      %p61 = scmp.eq.s32.totalorder %s18, 1
      %p62 = por %p60, %p61
      %p64 = scmp.ne.s32.totalorder %s49, %s63
      %p65 = scmp.eq.s32.totalorder %s18, 0
      %p66 = por %p64, %p65
      %s68 = sadd.s32 %s67, 1
      %p71 = scmp.eq.s32.totalorder %s12, 1
      %p72 = scmp.ne.s32.totalorder %s67, %s69
      %p73 = scmp.eq.s32.totalorder %s12, 0
      %p74 = por %p72, %p73
      %p75 = scmp.ne.s32.totalorder %s67, %s69
      %p76 = scmp.eq.s32.totalorder %s17, 1
      %p77 = por %p75, %p76
      %p78 = scmp.ne.s32.totalorder %s69, %s70
      %p79 = scmp.eq.s32.totalorder %s17, 0
      %p80 = por %p78, %p79
      %p81 = scmp.ne.s32.totalorder %s69, %s70
      %p82 = scmp.eq.s32.totalorder %s18, 1
      %p83 = por %p81, %p82
      %p85 = scmp.ne.s32.totalorder %s70, %s84
      %p86 = scmp.eq.s32.totalorder %s18, 0
      %p87 = por %p85, %p86
      %s89 = sadd.s32 %s88, 1
      %p92 = scmp.eq.s32.totalorder %s12, 1
      %p93 = scmp.ne.s32.totalorder %s88, %s90
      %p94 = scmp.eq.s32.totalorder %s12, 0
      %p95 = por %p93, %p94
      %p96 = scmp.ne.s32.totalorder %s88, %s90
      %p97 = scmp.eq.s32.totalorder %s17, 1
      %p98 = por %p96, %p97
      %p99 = scmp.ne.s32.totalorder %s90, %s91
      %p100 = scmp.eq.s32.totalorder %s17, 0
      %p101 = por %p99, %p100
      %p102 = scmp.ne.s32.totalorder %s90, %s91
      %p103 = scmp.eq.s32.totalorder %s18, 1
      %p104 = por %p102, %p103
      %p106 = scmp.ne.s32.totalorder %s91, %s105
      %p107 = scmp.eq.s32.totalorder %s18, 0
      %p108 = por %p106, %p107
      %s110 = sadd.s32 %s109, 1
      %p113 = scmp.eq.s32.totalorder %s12, 1
      %p114 = scmp.ne.s32.totalorder %s109, %s111
      %p115 = scmp.eq.s32.totalorder %s12, 0
      %p116 = por %p114, %p115
      %p117 = scmp.ne.s32.totalorder %s109, %s111
      %p118 = scmp.eq.s32.totalorder %s17, 1
      %p119 = por %p117, %p118
      %p120 = scmp.ne.s32.totalorder %s111, %s112
      %p121 = scmp.eq.s32.totalorder %s17, 0
      %p122 = por %p120, %p121
      %p123 = scmp.ne.s32.totalorder %s111, %s112
      %p124 = scmp.eq.s32.totalorder %s18, 1
      %p125 = por %p123, %p124
      %p127 = scmp.ne.s32.totalorder %s112, %s126
      %p128 = scmp.eq.s32.totalorder %s18, 0
      %p129 = por %p127, %p128
      %s130 = ssub.s32 %s12, %s19
      %p131 = scmp.eq.s32.totalorder %s130, 0
      %s133 = sadd.s32 %s132, 1
      %s134 = scalar_select %p131, %s132, %s133
      %p137 = pneg %p131
      %p138 = scmp.eq.s32.totalorder %s12, 1
      %p139 = por %p137, %p138
      %p140 = scmp.ne.s32.totalorder %s132, %s135
      %p141 = scmp.eq.s32.totalorder %s12, 0
      %p142 = por %p140, %p141
      %p143 = scmp.ne.s32.totalorder %s132, %s135
      %p144 = scmp.eq.s32.totalorder %s17, 1
      %p145 = por %p143, %p144
      %p146 = scmp.ne.s32.totalorder %s135, %s136
      %p147 = scmp.eq.s32.totalorder %s17, 0
      %p148 = por %p146, %p147
      %p149 = scmp.ne.s32.totalorder %s135, %s136
      %p150 = scmp.eq.s32.totalorder %s18, 1
      %p151 = por %p149, %p150
      %p153 = scmp.ne.s32.totalorder %s136, %s152
      %p154 = scmp.eq.s32.totalorder %s18, 0
      %p155 = por %p153, %p154
      %p156 = scmp.le.s32.totalorder 1, %s12
      %p157 = scmp.lt.s32.totalorder %s12, 3
      %p158 = pnand %p156, %p157
      %p159 = pneg %p158
      // Predicated region
      $region9: #{tpu_custom_call.1} parent=5 // pred_check
        _
      $region10: #{tpu_custom_call.1} parent=5 // pred_check_branch
        %161 = sbr.rel (%p158) target = $region12
      $region11: #{tpu_custom_call.1} parent=5 // pred_region
        %s162 = ssub.s32 %s12, 1
        // Predicated region
        $region13: #{tpu_custom_call.1} parent=11 // pred_check
          %p163 = pneg %p59
        $region14: #{tpu_custom_call.1} parent=11 // pred_check_branch
          %165 = sbr.rel (%p163) target = $region16
        $region15: #{tpu_custom_call.1} parent=11 // pred_region
          _
        $region16: #{tpu_custom_call.1} parent=11 // pred_fallthru
          _
        // Predicated region
        $region17: #{tpu_custom_call.1} parent=11 // pred_check
          %p166 = pneg %p80
        $region18: #{tpu_custom_call.1} parent=11 // pred_check_branch
          %168 = sbr.rel (%p166) target = $region20
        $region19: #{tpu_custom_call.1} parent=11 // pred_region
          %170 = vsyncadd [#allocation3], 0
          %s171 = sshll.u32 %s2, 4
          %s172 = int_to_ptr.hbm [resolvable:$true] %s171
          %s173 = sshll.u32 [#allocation2], 4
          %s174 = int_to_ptr.vmem [resolvable:$true] %s173
          %179 = dma.hbm_to_vmem [thread:$0]  %s172, 6144, %s174, [#allocation3], 128, 128, 8
        $region20: #{tpu_custom_call.1} parent=11 // pred_fallthru
          _
        // Predicated region
        $region21: #{tpu_custom_call.1} parent=11 // pred_check
          %p180 = pneg %p101
        $region22: #{tpu_custom_call.1} parent=11 // pred_check_branch
          %182 = sbr.rel (%p180) target = $region24
        $region23: #{tpu_custom_call.1} parent=11 // pred_region
          _
        $region24: #{tpu_custom_call.1} parent=11 // pred_fallthru
          _
        // Predicated region
        $region25: #{tpu_custom_call.1} parent=11 // pred_check
          %p183 = pneg %p122
        $region26: #{tpu_custom_call.1} parent=11 // pred_check_branch
          %185 = sbr.rel (%p183) target = $region28
        $region27: #{tpu_custom_call.1} parent=11 // pred_region
          _
        $region28: #{tpu_custom_call.1} parent=11 // pred_fallthru
          _
      $region12: #{tpu_custom_call.1} parent=5 // pred_fallthru
        _
      %p186 = scmp.lt.s32.totalorder %s12, 2
      // Predicated region
      $region29: #{tpu_custom_call.1} parent=5 // pred_check
        %p187 = pneg %p186
      $region30: #{tpu_custom_call.1} parent=5 // pred_check_branch
        %189 = sbr.rel (%p187) target = $region32
      $region31: #{tpu_custom_call.1} parent=5 // pred_region
        // Predicated region
        $region33: #{tpu_custom_call.1} parent=31 // pred_check
          %p190 = pneg %p32
        $region34: #{tpu_custom_call.1} parent=31 // pred_check_branch
          %192 = sbr.rel (%p190) target = $region36
        $region35: #{tpu_custom_call.1} parent=31 // pred_region
          %s193 = smul.u32 4, %s12
          %p194 = scmp.lt.s32.totalorder %s193, 7
          %s195 = scalar_select %p194, %s193, 7
          %s196 = smul.addr %s195, 8
          %s197 = scalar_lea.vmem %s0, %s196
          %s198 = smul.u32 4, %s12
        $region36: #{tpu_custom_call.1} parent=31 // pred_fallthru
          _
      $region32: #{tpu_custom_call.1} parent=5 // pred_fallthru
        _
      %p199 = scmp.le.s32.totalorder 1, %s12
      %p200 = scmp.lt.s32.totalorder %s12, 3
      %p201 = pnand %p199, %p200
      %p202 = pneg %p201
      // Predicated region
      $region37: #{tpu_custom_call.1} parent=5 // pred_check
        _
      $region38: #{tpu_custom_call.1} parent=5 // pred_check_branch
        %204 = sbr.rel (%p201) target = $region40
      $region39: #{tpu_custom_call.1} parent=5 // pred_region
        %s205 = ssub.s32 %s12, 1
        // Predicated region
        $region41: #{tpu_custom_call.1} parent=39 // pred_check
          %p206 = pneg %p80
        $region42: #{tpu_custom_call.1} parent=39 // pred_check_branch
          %208 = sbr.rel (%p206) target = $region44
        $region43: #{tpu_custom_call.1} parent=39 // pred_region
          %210 = dma.done [#allocation3], 6144
        $region44: #{tpu_custom_call.1} parent=39 // pred_fallthru
          _
        %s211 = smul.u32 4, %s17
        %p212 = scmp.lt.s32.totalorder %s211, 7
        %s213 = scalar_select %p212, %s211, 7
        %s214 = smul.addr %s213, 8
        %s215 = scalar_lea.vmem %s0, %s214
        %p216 = pneg %p38
        %p217 = pneg %p35
        %p218 = pneg %p59
        %p219 = pneg %p56
        %p220 = pneg %p80
        %p221 = pneg %p77
        %p222 = pneg %p101
        %p223 = pneg %p98
        %p224 = pneg %p122
        %p225 = pneg %p119
        %p226 = pneg %p148
        %p227 = pneg %p145
        %s228 = smul.u32 4, %s17
        %p229 = scmp.lt.s32.totalorder %s228, 7
        %s230 = scalar_select %p229, %s228, 7
        %s231 = smul.addr %s230, 8
        %s232 = scalar_lea.vmem %s5, %s231
        %s233 = smul.u32 4, %s17
        %p234 = scmp.lt.s32.totalorder %s233, 7
        %s235 = scalar_select %p234, %s233, 7
        %s236 = smul.addr %s235, 8
        %s237 = scalar_lea.vmem %s0, %s236
        %s238 = smul.u32 4, %s17
        %s239 = smul.u32 4, %s17
        %p240 = scmp.lt.s32.totalorder %s239, 7
        %s241 = scalar_select %p240, %s239, 7
        %s242 = smul.addr %s241, 8
        %s243 = scalar_lea.vmem %s5, %s242
        %s244 = smul.u32 4, %s17
        %v245 = vld [vmem:[%s237] sm:$0xff]
        %v246 = vld [vmem:[%s237 + $0x8] sm:$0xff]
        %v247 = vld [vmem:[%s237 + $0x10] sm:$0xff]
        %v248 = vld [vmem:[%s237 + $0x18] sm:$0xff]
        %v249 = vld [vmem:[%s1] sm:$0xff]
        %v250 = vld [vmem:[%s1 + $0x8] sm:$0xff]
        %v251 = vld [vmem:[%s1 + $0x10] sm:$0xff]
        %v252 = vld [vmem:[%s1 + $0x18] sm:$0xff]
        %vm253 = vcmask 261120
        %v255 = vsel %vm253, %v245, 0
        %v258 = vsel %vm253, %v246, 0
        %v261 = vsel %vm253, %v247, 0
        %v264 = vsel %vm253, %v248, 0
        %266 = vmatpush.msra.mxu0 0.0
        %267 = vmatpush.msra.mxu0 0.0
        %268 = vmatpush.msra.mxu0 0.0
        %269 = vmatpush.msra.mxu0 0.0
        %270 = vmatpush.msra.mxu0 0.0
        %271 = vmatpush.msra.mxu0 0.0
        %272 = vmatpush.msra.mxu0 0.0
        %273 = vmatpush.msra.mxu0 0.0
        %274 = vmatpush.msra.mxu0 0.0
        %275 = vmatpush.msra.mxu0 0.0
        %276 = vmatpush.msra.mxu0 0.0
        %277 = vmatpush.msra.mxu0 0.0
        %278 = vmatpush.msra.mxu0 %v252
        %279 = vmatpush.msra.mxu0 %v251
        %280 = vmatpush.msra.mxu0 %v250
        %281 = vmatpush.msra.mxu0 %v249
        %282 = vmatmul.f32.gmra.mxu0 %v255
        %v283 = vpop.f32.mrf.mxu0
        %v284 = vadd.f32 0.0, %v283
        %285 = vmatmul.f32.gmra.mxu0 %v258
        %v286 = vpop.f32.mrf.mxu0
        %v287 = vadd.f32 0.0, %v286
        %288 = vmatmul.f32.gmra.mxu0 %v261
        %v289 = vpop.f32.mrf.mxu0
        %v290 = vadd.f32 0.0, %v289
        %291 = vmatmul.f32.gmra.mxu0 %v264
        %v292 = vpop.f32.mrf.mxu0
        %v293 = vadd.f32 0.0, %v292
        %294 = vdwg.mxu0
        %s295 = scalar_lea.vmem [#allocation2], 256
        %v296 = vld [vmem:[%s295] sm:$0xff]
        %v297 = vld [vmem:[%s295 + $0x8] sm:$0xff]
        %v298 = vld [vmem:[%s295 + $0x10] sm:$0xff]
        %v299 = vld [vmem:[%s295 + $0x18] sm:$0xff]
        %s300 = scalar_lea.vmem [#allocation2], 32
        %v301 = vld [vmem:[%s300] sm:$0xff]
        %v302 = vld [vmem:[%s300 + $0x8] sm:$0xff]
        %v303 = vld [vmem:[%s300 + $0x10] sm:$0xff]
        %v304 = vld [vmem:[%s300 + $0x18] sm:$0xff]
        %v305 = vmul.f32 %v301, %v284
        %v306 = vmul.f32 %v302, %v287
        %v307 = vmul.f32 %v303, %v290
        %v308 = vmul.f32 %v304, %v293
        %v309 = vadd.f32 %v296, %v305
        %v310 = vadd.f32 %v297, %v306
        %v311 = vadd.f32 %v298, %v307
        %v312 = vadd.f32 %v299, %v308
        %v313 = vld [vmem:[#allocation2] sm:$0xff]
        %v314 = vld [vmem:[#allocation2 + $0x8] sm:$0xff]
        %v315 = vld [vmem:[#allocation2 + $0x10] sm:$0xff]
        %v316 = vld [vmem:[#allocation2 + $0x18] sm:$0xff]
        %v317 = vrot.slane %v284, 7
        %v318 = vrot.slane %v287, 7
        %v319 = vrot.slane %v290, 7
        %v320 = vrot.slane %v293, 7
        %v321 = vlaneseq
        %v322 = vshrl.u32 %v321, 7
        %vm323 = vcmp.lt.s32.totalorder %v322, 1
        %v324 = vsel %vm323, %v319, %v320
        %v325 = vsel %vm323, %v318, %v319
        %v326 = vsel %vm323, %v317, %v318
        %v327 = vsel %vm323, %v320, %v317
        %v328 = vmul.f32 %v313, %v327
        %v329 = vmul.f32 %v314, %v326
        %v330 = vmul.f32 %v315, %v325
        %v331 = vmul.f32 %v316, %v324
        %v332 = vadd.f32 %v309, %v328
        %v333 = vadd.f32 %v310, %v329
        %v334 = vadd.f32 %v311, %v330
        %v335 = vadd.f32 %v312, %v331
        %s336 = scalar_lea.vmem [#allocation2], 64
        %v337 = vld [vmem:[%s336] sm:$0xff]
        %v338 = vld [vmem:[%s336 + $0x8] sm:$0xff]
        %v339 = vld [vmem:[%s336 + $0x10] sm:$0xff]
        %v340 = vld [vmem:[%s336 + $0x18] sm:$0xff]
        %v341 = vrot.slane %v284, 1
        %v342 = vrot.slane %v287, 1
        %v343 = vrot.slane %v290, 1
        %v344 = vrot.slane %v293, 1
        %vm345 = vcmp.lt.s32.totalorder %v322, 7
        %v346 = vsel %vm345, %v343, %v344
        %v347 = vsel %vm345, %v342, %v343
        %v348 = vsel %vm345, %v341, %v342
        %v349 = vsel %vm345, %v344, %v341
        %v350 = vmul.f32 %v337, %v348
        %v351 = vmul.f32 %v338, %v347
        %v352 = vmul.f32 %v339, %v346
        %v353 = vmul.f32 %v340, %v349
        %v354 = vadd.f32 %v332, %v350
        %v355 = vadd.f32 %v333, %v351
        %v356 = vadd.f32 %v334, %v352
        %v357 = vadd.f32 %v335, %v353
        %s358 = scalar_lea.vmem [#allocation2], 288
        %v359 = vld [vmem:[%s358] sm:$0xff]
        %v360 = vld [vmem:[%s358 + $0x8] sm:$0xff]
        %v361 = vld [vmem:[%s358 + $0x10] sm:$0xff]
        %v362 = vld [vmem:[%s358 + $0x18] sm:$0xff]
        %s363 = scalar_lea.vmem [#allocation2], 160
        %v364 = vld [vmem:[%s363] sm:$0xff]
        %v365 = vld [vmem:[%s363 + $0x8] sm:$0xff]
        %v366 = vld [vmem:[%s363 + $0x10] sm:$0xff]
        %v367 = vld [vmem:[%s363 + $0x18] sm:$0xff]
        %v368 = vmul.f32 %v364, %v354
        %v369 = vmul.f32 %v365, %v355
        %v370 = vmul.f32 %v366, %v356
        %v371 = vmul.f32 %v367, %v357
        %v372 = vadd.f32 %v359, %v368
        %v373 = vadd.f32 %v360, %v369
        %v374 = vadd.f32 %v361, %v370
        %v375 = vadd.f32 %v362, %v371
        %s376 = scalar_lea.vmem [#allocation2], 96
        %v377 = vld [vmem:[%s376] sm:$0xff]
        %v378 = vld [vmem:[%s376 + $0x8] sm:$0xff]
        %v379 = vld [vmem:[%s376 + $0x10] sm:$0xff]
        %v380 = vld [vmem:[%s376 + $0x18] sm:$0xff]
        %v381 = vrot.slane %v354, 6
        %v382 = vrot.slane %v355, 6
        %v383 = vrot.slane %v356, 6
        %v384 = vrot.slane %v357, 6
        %vm385 = vcmp.lt.s32.totalorder %v322, 2
        %v386 = vsel %vm385, %v383, %v384
        %v387 = vsel %vm385, %v382, %v383
        %v388 = vsel %vm385, %v381, %v382
        %v389 = vsel %vm385, %v384, %v381
        %v390 = vmul.f32 %v377, %v389
        %v391 = vmul.f32 %v378, %v388
        %v392 = vmul.f32 %v379, %v387
        %v393 = vmul.f32 %v380, %v386
        %v394 = vadd.f32 %v372, %v390
        %v395 = vadd.f32 %v373, %v391
        %v396 = vadd.f32 %v374, %v392
        %v397 = vadd.f32 %v375, %v393
        %s398 = scalar_lea.vmem [#allocation2], 128
        %v399 = vld [vmem:[%s398] sm:$0xff]
        %v400 = vld [vmem:[%s398 + $0x8] sm:$0xff]
        %v401 = vld [vmem:[%s398 + $0x10] sm:$0xff]
        %v402 = vld [vmem:[%s398 + $0x18] sm:$0xff]
        %v403 = vrot.slane %v354, 7
        %v404 = vrot.slane %v355, 7
        %v405 = vrot.slane %v356, 7
        %v406 = vrot.slane %v357, 7
        %v407 = vsel %vm323, %v405, %v406
        %v408 = vsel %vm323, %v404, %v405
        %v409 = vsel %vm323, %v403, %v404
        %v410 = vsel %vm323, %v406, %v403
        %v411 = vmul.f32 %v399, %v410
        %v412 = vmul.f32 %v400, %v409
        %v413 = vmul.f32 %v401, %v408
        %v414 = vmul.f32 %v402, %v407
        %v415 = vadd.f32 %v394, %v411
        %v416 = vadd.f32 %v395, %v412
        %v417 = vadd.f32 %v396, %v413
        %v418 = vadd.f32 %v397, %v414
        %s419 = scalar_lea.vmem [#allocation2], 192
        %v420 = vld [vmem:[%s419] sm:$0xff]
        %v421 = vld [vmem:[%s419 + $0x8] sm:$0xff]
        %v422 = vld [vmem:[%s419 + $0x10] sm:$0xff]
        %v423 = vld [vmem:[%s419 + $0x18] sm:$0xff]
        %v424 = vrot.slane %v354, 1
        %v425 = vrot.slane %v355, 1
        %v426 = vrot.slane %v356, 1
        %v427 = vrot.slane %v357, 1
        %v428 = vsel %vm345, %v426, %v427
        %v429 = vsel %vm345, %v425, %v426
        %v430 = vsel %vm345, %v424, %v425
        %v431 = vsel %vm345, %v427, %v424
        %v432 = vmul.f32 %v420, %v430
        %v433 = vmul.f32 %v421, %v429
        %v434 = vmul.f32 %v422, %v428
        %v435 = vmul.f32 %v423, %v431
        %v436 = vadd.f32 %v415, %v432
        %v437 = vadd.f32 %v416, %v433
        %v438 = vadd.f32 %v417, %v434
        %v439 = vadd.f32 %v418, %v435
        %s440 = scalar_lea.vmem [#allocation2], 224
        %v441 = vld [vmem:[%s440] sm:$0xff]
        %v442 = vld [vmem:[%s440 + $0x8] sm:$0xff]
        %v443 = vld [vmem:[%s440 + $0x10] sm:$0xff]
        %v444 = vld [vmem:[%s440 + $0x18] sm:$0xff]
        %v445 = vrot.slane %v354, 2
        %v446 = vrot.slane %v355, 2
        %v447 = vrot.slane %v356, 2
        %v448 = vrot.slane %v357, 2
        %vm449 = vcmp.lt.s32.totalorder %v322, 6
        %v450 = vsel %vm449, %v447, %v448
        %v451 = vsel %vm449, %v446, %v447
        %v452 = vsel %vm449, %v445, %v446
        %v453 = vsel %vm449, %v448, %v445
        %v454 = vmul.f32 %v441, %v452
        %v455 = vmul.f32 %v442, %v451
        %v456 = vmul.f32 %v443, %v450
        %v457 = vmul.f32 %v444, %v453
        %v458 = vadd.f32 %v436, %v454
        %v459 = vadd.f32 %v437, %v455
        %v460 = vadd.f32 %v438, %v456
        %v461 = vadd.f32 %v439, %v457
        %462 = vadd.xlane.f32.xlu0 %v458
        %v463 = vpop.xlane.xlu0 %462
        %464 = vadd.xlane.f32.xlu0 %v459
        %v465 = vpop.xlane.xlu0 %464
        %466 = vadd.xlane.f32.xlu0 %v460
        %v467 = vpop.xlane.xlu0 %466
        %468 = vadd.xlane.f32.xlu0 %v461
        %v469 = vpop.xlane.xlu0 %468
        %v470 = vmul.f32 %v458, %v458
        %v471 = vmul.f32 %v459, %v459
        %v472 = vmul.f32 %v460, %v460
        %v473 = vmul.f32 %v461, %v461
        %474 = vadd.xlane.f32.xlu0 %v470
        %v475 = vpop.xlane.xlu0 %474
        %476 = vadd.xlane.f32.xlu0 %v471
        %v477 = vpop.xlane.xlu0 %476
        %478 = vadd.xlane.f32.xlu0 %v472
        %v479 = vpop.xlane.xlu0 %478
        %480 = vadd.xlane.f32.xlu0 %v473
        %v481 = vpop.xlane.xlu0 %480
        %v482 = vmul.f32 %v463, 0.0078125
        %v483 = vmul.f32 %v465, 0.0078125
        %v484 = vmul.f32 %v467, 0.0078125
        %v485 = vmul.f32 %v469, 0.0078125
        %v486 = vmul.f32 %v475, 0.0078125
        %v487 = vmul.f32 %v477, 0.0078125
        %v488 = vmul.f32 %v479, 0.0078125
        %v489 = vmul.f32 %v481, 0.0078125
        %v490 = vmul.f32 %v482, %v482
        %v491 = vmul.f32 %v483, %v483
        %v492 = vmul.f32 %v484, %v484
        %v493 = vmul.f32 %v485, %v485
        %v494 = vsub.f32 %v486, %v490
        %v495 = vsub.f32 %v487, %v491
        %v496 = vsub.f32 %v488, %v492
        %v497 = vsub.f32 %v489, %v493
        %v498 = vsub.f32 %v458, %v482
        %v499 = vsub.f32 %v459, %v483
        %v500 = vsub.f32 %v460, %v484
        %v501 = vsub.f32 %v461, %v485
        %v502 = vadd.f32 %v494, 1e-05
        %v503 = vadd.f32 %v495, 1e-05
        %v504 = vadd.f32 %v496, 1e-05
        %v505 = vadd.f32 %v497, 1e-05
        %v506 = vrsqrt.pop %v502
        %v507 = vmul.f32 %v506, %v502
        %v508 = vmul.f32 %v507, %v506
        %v509 = vmul.f32 0.5, %v508
        %v510 = vsub.f32 1.5, %v509
        %v511 = vmul.f32 %v506, %v510
        %vm512 = vweird.f32 %v502
        %vm513 = vweird.f32 %v506
        %vm514 = vmor %vm512, %vm513
        %v515 = vsel %vm514, %v506, %v511
        %v516 = vrsqrt.pop %v503
        %v517 = vmul.f32 %v516, %v503
        %v518 = vmul.f32 %v517, %v516
        %v519 = vmul.f32 0.5, %v518
        %v520 = vsub.f32 1.5, %v519
        %v521 = vmul.f32 %v516, %v520
        %vm522 = vweird.f32 %v503
        %vm523 = vweird.f32 %v516
        %vm524 = vmor %vm522, %vm523
        %v525 = vsel %vm524, %v516, %v521
        %v526 = vrsqrt.pop %v504
        %v527 = vmul.f32 %v526, %v504
        %v528 = vmul.f32 %v527, %v526
        %v529 = vmul.f32 0.5, %v528
        %v530 = vsub.f32 1.5, %v529
        %v531 = vmul.f32 %v526, %v530
        %vm532 = vweird.f32 %v504
        %vm533 = vweird.f32 %v526
        %vm534 = vmor %vm532, %vm533
        %v535 = vsel %vm534, %v526, %v531
        %v536 = vrsqrt.pop %v505
        %v537 = vmul.f32 %v536, %v505
        %v538 = vmul.f32 %v537, %v536
        %v539 = vmul.f32 0.5, %v538
        %v540 = vsub.f32 1.5, %v539
        %v541 = vmul.f32 %v536, %v540
        %vm542 = vweird.f32 %v505
        %vm543 = vweird.f32 %v536
        %vm544 = vmor %vm542, %vm543
        %v545 = vsel %vm544, %v536, %v541
        %v546 = vmul.f32 %v498, %v515
        %v547 = vmul.f32 %v499, %v525
        %v548 = vmul.f32 %v500, %v535
        %v549 = vmul.f32 %v501, %v545
        %s550 = scalar_lea.vmem [#allocation2], 320
        %v551 = vld [vmem:[%s550] sm:$0xff]
        %v552 = vld [vmem:[%s550 + $0x8] sm:$0xff]
        %v553 = vld [vmem:[%s550 + $0x10] sm:$0xff]
        %v554 = vld [vmem:[%s550 + $0x18] sm:$0xff]
        %v555 = vmul.f32 %v546, %v551
        %v556 = vmul.f32 %v547, %v552
        %v557 = vmul.f32 %v548, %v553
        %v558 = vmul.f32 %v549, %v554
        %s559 = scalar_lea.vmem [#allocation2], 352
        %v560 = vld [vmem:[%s559] sm:$0xff]
        %v561 = vld [vmem:[%s559 + $0x8] sm:$0xff]
        %v562 = vld [vmem:[%s559 + $0x10] sm:$0xff]
        %v563 = vld [vmem:[%s559 + $0x18] sm:$0xff]
        %v564 = vadd.f32 %v555, %v560
        %v565 = vadd.f32 %v556, %v561
        %v566 = vadd.f32 %v557, %v562
        %v567 = vadd.f32 %v558, %v563
        %v568 = vmul.f32 %v564, 0.5
        %v569 = vmul.f32 %v565, 0.5
        %v570 = vmul.f32 %v566, 0.5
        %v571 = vmul.f32 %v567, 0.5
        %v572 = vmul.f32 %v564, 0.044715
        %v573 = vmul.f32 %v565, 0.044715
        %v574 = vmul.f32 %v566, 0.044715
        %v575 = vmul.f32 %v567, 0.044715
        %v576 = vmul.f32 %v572, %v564
        %v577 = vmul.f32 %v573, %v565
        %v578 = vmul.f32 %v574, %v566
        %v579 = vmul.f32 %v575, %v567
        %v580 = vmul.f32 %v576, %v564
        %v581 = vmul.f32 %v577, %v565
        %v582 = vmul.f32 %v578, %v566
        %v583 = vmul.f32 %v579, %v567
        %v584 = vadd.f32 %v564, %v580
        %v585 = vadd.f32 %v565, %v581
        %v586 = vadd.f32 %v566, %v582
        %v587 = vadd.f32 %v567, %v583
        %v588 = vmul.f32 %v584, 0.7978846
        %v589 = vmul.f32 %v585, 0.7978846
        %v590 = vmul.f32 %v586, 0.7978846
        %v591 = vmul.f32 %v587, 0.7978846
        %v592 = vtanh.pop %v588
        %v593 = vtanh.pop %v589
        %v594 = vtanh.pop %v590
        %v595 = vtanh.pop %v591
        %v596 = vadd.f32 %v592, 1.0
        %v597 = vadd.f32 %v593, 1.0
        %v598 = vadd.f32 %v594, 1.0
        %v599 = vadd.f32 %v595, 1.0
        %v600 = vmul.f32 %v568, %v596
        %v601 = vmul.f32 %v569, %v597
        %v602 = vmul.f32 %v570, %v598
        %v603 = vmul.f32 %v571, %v599
        %v604 = vmul.f32 %v600, 0.5
        %v605 = vmul.f32 %v601, 0.5
        %v606 = vmul.f32 %v602, 0.5
        %v607 = vmul.f32 %v603, 0.5
        %v608 = vmul.f32 %v600, 0.044715
        %v609 = vmul.f32 %v601, 0.044715
        %v610 = vmul.f32 %v602, 0.044715
        %v611 = vmul.f32 %v603, 0.044715
        %v612 = vmul.f32 %v608, %v600
        %v613 = vmul.f32 %v609, %v601
        %v614 = vmul.f32 %v610, %v602
        %v615 = vmul.f32 %v611, %v603
        %v616 = vmul.f32 %v612, %v600
        %v617 = vmul.f32 %v613, %v601
        %v618 = vmul.f32 %v614, %v602
        %v619 = vmul.f32 %v615, %v603
        %v620 = vadd.f32 %v600, %v616
        %v621 = vadd.f32 %v601, %v617
        %v622 = vadd.f32 %v602, %v618
        %v623 = vadd.f32 %v603, %v619
        %v624 = vmul.f32 %v620, 0.7978846
        %v625 = vmul.f32 %v621, 0.7978846
        %v626 = vmul.f32 %v622, 0.7978846
        %v627 = vmul.f32 %v623, 0.7978846
        %v628 = vtanh.pop %v624
        %v629 = vtanh.pop %v625
        %v630 = vtanh.pop %v626
        %v631 = vtanh.pop %v627
        %v632 = vadd.f32 %v628, 1.0
        %v633 = vadd.f32 %v629, 1.0
        %v634 = vadd.f32 %v630, 1.0
        %v635 = vadd.f32 %v631, 1.0
        %v636 = vmul.f32 %v604, %v632
        %v637 = vmul.f32 %v605, %v633
        %v638 = vmul.f32 %v606, %v634
        %v639 = vmul.f32 %v607, %v635
        %v640 = vld [vmem:[%s3] sm:$0xff]
        %v641 = vld [vmem:[%s3 + $0x8] sm:$0xff]
        %v642 = vld [vmem:[%s3 + $0x10] sm:$0xff]
        %v643 = vld [vmem:[%s3 + $0x18] sm:$0xff]
        %v644 = vld [vmem:[%s3 + $0x20] sm:$0xff]
        %v645 = vld [vmem:[%s3 + $0x28] sm:$0xff]
        %v646 = vld [vmem:[%s3 + $0x30] sm:$0xff]
        %v647 = vld [vmem:[%s3 + $0x38] sm:$0xff]
        %v648 = vld [vmem:[%s3 + $0x40] sm:$0xff]
        %v649 = vld [vmem:[%s3 + $0x48] sm:$0xff]
        %v650 = vld [vmem:[%s3 + $0x50] sm:$0xff]
        %v651 = vld [vmem:[%s3 + $0x58] sm:$0xff]
        %v652 = vld [vmem:[%s3 + $0x60] sm:$0xff]
        %v653 = vld [vmem:[%s3 + $0x68] sm:$0xff]
        %v654 = vld [vmem:[%s3 + $0x70] sm:$0xff]
        %v655 = vld [vmem:[%s3 + $0x78] sm:$0xff]
        %v656 = vld [vmem:[%s4] sm:$0x1]
        %v658 = vperm.slane %v656, 0
        %660 = vmatpush.msra.mxu0 %v655
        %661 = vmatpush.msra.mxu0 %v654
        %662 = vmatpush.msra.mxu0 %v653
        %663 = vmatpush.msra.mxu0 %v652
        %664 = vmatpush.msra.mxu0 %v651
        %665 = vmatpush.msra.mxu0 %v650
        %666 = vmatpush.msra.mxu0 %v649
        %667 = vmatpush.msra.mxu0 %v648
        %668 = vmatpush.msra.mxu0 %v647
        %669 = vmatpush.msra.mxu0 %v646
        %670 = vmatpush.msra.mxu0 %v645
        %671 = vmatpush.msra.mxu0 %v644
        %672 = vmatpush.msra.mxu0 %v643
        %673 = vmatpush.msra.mxu0 %v642
        %674 = vmatpush.msra.mxu0 %v641
        %675 = vmatpush.msra.mxu0 %v640
        %676 = vmatmul.f32.gmra.mxu0 %v636
        %v677 = vpop.f32.mrf.mxu0
        %v678 = vadd.f32 %v658, %v677
        %679 = vmatmul.f32.gmra.mxu0 %v637
        %v680 = vpop.f32.mrf.mxu0
        %v681 = vadd.f32 %v658, %v680
        %682 = vmatmul.f32.gmra.mxu0 %v638
        %v683 = vpop.f32.mrf.mxu0
        %v684 = vadd.f32 %v658, %v683
        %685 = vmatmul.f32.gmra.mxu0 %v639
        %v686 = vpop.f32.mrf.mxu0
        %v687 = vadd.f32 %v658, %v686
        %688 = vdwg.mxu0
        %689 = vst.msk [vmem:[%s243] sm:$0xff] %vm253, %v678
        %690 = vst.msk [vmem:[%s243 + $0x8] sm:$0xff] %vm253, %v681
        %691 = vst.msk [vmem:[%s243 + $0x10] sm:$0xff] %vm253, %v684
        %692 = vst.msk [vmem:[%s243 + $0x18] sm:$0xff] %vm253, %v687
        %s693 = smul.u32 4, %s17
        %p694 = scmp.lt.s32.totalorder %s693, 7
        %s695 = scalar_select %p694, %s693, 7
        %s696 = smul.addr %s695, 8
        %s697 = scalar_lea.vmem %s5, %s696
        // Predicated region
        $region45: #{tpu_custom_call.1} parent=39 // pred_check
          %p698 = pneg %p145
        $region46: #{tpu_custom_call.1} parent=39 // pred_check_branch
          %700 = sbr.rel (%p698) target = $region48
        $region47: #{tpu_custom_call.1} parent=39 // pred_region
          %s701 = smul.u32 4, %s17
        $region48: #{tpu_custom_call.1} parent=39 // pred_fallthru
          _
      $region40: #{tpu_custom_call.1} parent=5 // pred_fallthru
        _
      %p702 = scmp.le.s32.totalorder 2, %s12
      // Predicated region
      $region49: #{tpu_custom_call.1} parent=5 // pred_check
        %p703 = pneg %p702
      $region50: #{tpu_custom_call.1} parent=5 // pred_check_branch
        %705 = sbr.rel (%p703) target = $region52
      $region51: #{tpu_custom_call.1} parent=5 // pred_region
        %s706 = ssub.s32 %s12, 2
        // Predicated region
        $region53: #{tpu_custom_call.1} parent=51 // pred_check
          %p707 = pneg %p151
        $region54: #{tpu_custom_call.1} parent=51 // pred_check_branch
          %709 = sbr.rel (%p707) target = $region56
        $region55: #{tpu_custom_call.1} parent=51 // pred_region
          %s710 = smul.u32 4, %s18
          %p711 = scmp.lt.s32.totalorder %s710, 7
          %s712 = scalar_select %p711, %s710, 7
          %s713 = smul.addr %s712, 8
          %s714 = scalar_lea.vmem %s5, %s713
        $region56: #{tpu_custom_call.1} parent=51 // pred_fallthru
          _
      $region52: #{tpu_custom_call.1} parent=5 // pred_fallthru
        _
    $region6: #{tpu_custom_call.1} parent=1 // loop_footer
      %s16 = sadd.s32 1, %s12
    $region7: #{tpu_custom_call.1} parent=1 // loop_footer_branch
      %11 = sbr.rel target = $region3
    $region8: #{tpu_custom_call.1} parent=1 // loop_exit
      _
    %715 = vsyncpa [#allocation3], 1
    %s716 = scalar_lea.sflag [#allocation3], 1
    %717 = vsyncpa %s716, 1

</llo_original>
